<compile_context>
chip_gen: v6e
topology: v6e:2x2x1
jax: 0.10.0
libtpu: 0.0.40
codegen_flags: <defaults>
</compile_context>

<pallas_src>
import jax
import jax.numpy as jnp
from jax.experimental import pallas as pl
from jax.experimental.pallas import tpu as pltpu

_EPS = 1e-5


def _layernorm_kernel_bias(x_ref, w_ref, b_ref, o_ref):
    x = x_ref[...].astype(jnp.float32)                       # (tr, H)
    inv_h = 1.0 / x.shape[-1]
    # Fused pass: the two reductions are independent -> shorter XLU chain.
    s1 = jnp.sum(x, axis=-1, keepdims=True)                  # sum(x)
    s2 = jnp.sum(x * x, axis=-1, keepdims=True)              # sum(x^2)
    mean = s1 * inv_h
    var = jnp.maximum(s2 * inv_h - mean * mean, 0.0)         # biased var (torch)
    inv = jax.lax.rsqrt(var + _EPS)                          # EUP slot
    y = (x - mean) * inv
    o_ref[...] = (y * w_ref[...] + b_ref[...]).astype(o_ref.dtype)


def _layernorm_kernel_nobias(x_ref, w_ref, o_ref):
    x = x_ref[...].astype(jnp.float32)
    inv_h = 1.0 / x.shape[-1]
    s1 = jnp.sum(x, axis=-1, keepdims=True)
    s2 = jnp.sum(x * x, axis=-1, keepdims=True)
    mean = s1 * inv_h
    var = jnp.maximum(s2 * inv_h - mean * mean, 0.0)
    inv = jax.lax.rsqrt(var + _EPS)
    o_ref[...] = ((x - mean) * inv * w_ref[...]).astype(o_ref.dtype)


def _sublane_multiple(dtype):
    # Packed sublane tiling: f32 -> 8 rows/vreg, bf16/f16 -> 16, int8/fp8 -> 32.
    return {4: 8, 2: 16, 1: 32}.get(jnp.dtype(dtype).itemsize, 8)


def _pick_block_rows(rows, hidden, dtype, target_block_bytes=4 * 1024 * 1024):
    """Pick a row-tile size: ~target_block_bytes per input block, sublane-aligned."""
    sub = _sublane_multiple(dtype)
    row_bytes = max(1, hidden * jnp.dtype(dtype).itemsize)
    br = max(sub, (target_block_bytes // row_bytes) // sub * sub)
    rows_rounded = pl.cdiv(rows, sub) * sub
    br = min(br, rows_rounded)
    # Prefer >= 2 grid steps: the "parallel" grid axis shards row-tiles across
    # the 2 TensorCores on v7x and amortizes pipeline warmup.
    if br >= rows_rounded and rows_rounded > sub:
        half = pl.cdiv(rows, 2 * sub) * sub
        br = max(sub, min(br, half))
    return int(br)


def layer_norm(x, weight, bias=None, *, block_rows=None):
    """LayerNorm over the last dim of `x`, matching F.layer_norm(..., eps=1e-5)."""
    orig_shape = x.shape
    hidden = orig_shape[-1]
    rows = 1
    for d in orig_shape[:-1]:
        rows *= d
    x2 = x.reshape(rows, hidden)

    if block_rows is None:
        block_rows = _pick_block_rows(rows, hidden, x.dtype)

    # No host-side padding: Pallas masks the ragged last block. Rows are
    # independent, so garbage in padded rows is computed and then discarded.
    grid = (pl.cdiv(rows, block_rows),)

    # Pre-cast the row-broadcast scale/shift to f32 once, outside the kernel.
    # The constant-index (1, hidden) block stays VMEM-resident across steps.
    w2 = weight.astype(jnp.float32).reshape(1, hidden)
    in_specs = [
        pl.BlockSpec((block_rows, hidden), lambda i: (i, 0)),
        pl.BlockSpec((1, hidden), lambda i: (0, 0)),
    ]
    args = [x2, w2]
    kernel = _layernorm_kernel_nobias
    if bias is not None:
        in_specs.append(pl.BlockSpec((1, hidden), lambda i: (0, 0)))
        args.append(bias.astype(jnp.float32).reshape(1, hidden))
        kernel = _layernorm_kernel_bias

    # VMEM budget: in + out double-buffered plus f32 working copies, with
    # slack; capped so it stays comfortably within v7x's 64 MiB physical VMEM.
    block_bytes = block_rows * hidden * jnp.dtype(x.dtype).itemsize
    vmem_limit = int(min(48 * 1024 * 1024,
                         max(16 * 1024 * 1024, 6 * block_bytes + (1 << 20))))

    # TODO(synk): for hidden not a multiple of 128 (e.g. 32), the output store
    # uses masked lanes; a row-folding re-layout would make stores lane-dense
    # but changes the reduction axis layout, so it is not done here.
    out = pl.pallas_call(
        kernel,
        out_shape=jax.ShapeDtypeStruct((rows, hidden), x.dtype),
        grid=grid,
        in_specs=in_specs,
        out_specs=pl.BlockSpec((block_rows, hidden), lambda i: (i, 0)),
        compiler_params=pltpu.CompilerParams(
            dimension_semantics=("parallel",),
            vmem_limit_bytes=vmem_limit),
    )(*args)

    return out.reshape(orig_shape)


if __name__ == "__main__":
    k1, k2 = jax.random.split(jax.random.PRNGKey(0))
    batch, seq, hidden = 2, 8, 32

    x = jax.random.normal(k1, (batch, seq, hidden), dtype=jnp.float32)

    # Parameters per LayerNorm.__init__(ndim=hidden, bias=True):
    weight = jnp.ones((hidden,), dtype=jnp.float32)
    bias = jnp.zeros((hidden,), dtype=jnp.float32)

    def ref_ln(x, w, b=None):
        mean = jnp.mean(x, axis=-1, keepdims=True)
        var = jnp.mean((x - mean) ** 2, axis=-1, keepdims=True)
        y = (x - mean) * jax.lax.rsqrt(var + 1e-5) * w
        return y + b if b is not None else y

    # bias path
    y = jax.block_until_ready(layer_norm(x, weight, bias))
    assert jnp.allclose(y, ref_ln(x, weight, bias), atol=2e-5, rtol=1e-5), "bias mismatch"

    # no-bias path
    y_nb = jax.block_until_ready(layer_norm(x, weight))
    assert jnp.allclose(y_nb, ref_ln(x, weight), atol=2e-5, rtol=1e-5), "no-bias mismatch"

    # ragged row count (rows % block_rows != 0) exercises the cdiv grid path
    xr = jax.random.normal(k2, (3, 7, hidden), dtype=jnp.float32)
    yr = jax.block_until_ready(layer_norm(xr, weight, bias))
    assert jnp.allclose(yr, ref_ln(xr, weight, bias), atol=2e-5, rtol=1e-5), "ragged mismatch"

    print("KERNEL_OK")
</pallas_src>

<mosaic_0001>
module attributes {stable_mosaic.version = 11 : i64} {
  func.func @_layernorm_kernel_bias(%arg0: i32, %arg1: memref<8x32xf32, #tpu.memory_space<vmem>>, %arg2: memref<1x32xf32, #tpu.memory_space<vmem>>, %arg3: memref<1x32xf32, #tpu.memory_space<vmem>>, %arg4: memref<8x32xf32, #tpu.memory_space<vmem>>) attributes {dimension_semantics = [#tpu.dimension_semantics<parallel>], iteration_bounds = array<i64: 2>, scalar_prefetch = 0 : i64, scratch_operands = 0 : i64, tpu.core_type = #tpu.core_type<tc>, window_params = [{transform_indices = @transform_0, window_bounds = array<i64: 8, 32>}, {pipeline_mode = #tpu.pipeline_mode<synchronous>, transform_indices = @transform_1, window_bounds = array<i64: 1, 32>}, {pipeline_mode = #tpu.pipeline_mode<synchronous>, transform_indices = @transform_2, window_bounds = array<i64: 1, 32>}, {transform_indices = @transform_3, window_bounds = array<i64: 8, 32>}]} {
    %c0 = arith.constant 0 : index
    %c0_0 = arith.constant 0 : index
    %0 = vector.load %arg1[%c0, %c0_0] : memref<8x32xf32, #tpu.memory_space<vmem>>, vector<8x32xf32>
    %cst = arith.constant dense<0.000000e+00> : vector<8xf32>
    %1 = vector.multi_reduction <add>, %0, %cst [1] : vector<8x32xf32> to vector<8xf32>
    %2 = vector.shape_cast %1 : vector<8xf32> to vector<8x1xf32>
    %3 = arith.mulf %0, %0 : vector<8x32xf32>
    %cst_1 = arith.constant dense<0.000000e+00> : vector<8xf32>
    %4 = vector.multi_reduction <add>, %3, %cst_1 [1] : vector<8x32xf32> to vector<8xf32>
    %5 = vector.shape_cast %4 : vector<8xf32> to vector<8x1xf32>
    %cst_2 = arith.constant 3.125000e-02 : f32
    %6 = vector.broadcast %cst_2 : f32 to vector<8x1xf32>
    %7 = arith.mulf %2, %6 : vector<8x1xf32>
    %cst_3 = arith.constant 3.125000e-02 : f32
    %8 = vector.broadcast %cst_3 : f32 to vector<8x1xf32>
    %9 = arith.mulf %5, %8 : vector<8x1xf32>
    %10 = arith.mulf %7, %7 : vector<8x1xf32>
    %11 = arith.subf %9, %10 : vector<8x1xf32>
    %cst_4 = arith.constant 0.000000e+00 : f32
    %12 = vector.broadcast %cst_4 : f32 to vector<8x1xf32>
    %13 = arith.maximumf %11, %12 : vector<8x1xf32>
    %cst_5 = arith.constant 9.99999974E-6 : f32
    %14 = vector.broadcast %cst_5 : f32 to vector<8x1xf32>
    %15 = arith.addf %13, %14 : vector<8x1xf32>
    %16 = math.rsqrt %15 : vector<8x1xf32>
    %17 = vector.broadcast %7 : vector<8x1xf32> to vector<8x32xf32>
    %18 = arith.subf %0, %17 : vector<8x32xf32>
    %19 = vector.broadcast %16 : vector<8x1xf32> to vector<8x32xf32>
    %20 = arith.mulf %18, %19 : vector<8x32xf32>
    %c0_6 = arith.constant 0 : index
    %c0_7 = arith.constant 0 : index
    %21 = vector.load %arg2[%c0_6, %c0_7] : memref<1x32xf32, #tpu.memory_space<vmem>>, vector<1x32xf32>
    %22 = vector.broadcast %21 : vector<1x32xf32> to vector<8x32xf32>
    %23 = arith.mulf %20, %22 : vector<8x32xf32>
    %c0_8 = arith.constant 0 : index
    %c0_9 = arith.constant 0 : index
    %24 = vector.load %arg3[%c0_8, %c0_9] : memref<1x32xf32, #tpu.memory_space<vmem>>, vector<1x32xf32>
    %25 = vector.broadcast %24 : vector<1x32xf32> to vector<8x32xf32>
    %26 = arith.addf %23, %25 : vector<8x32xf32>
    %c0_10 = arith.constant 0 : index
    %c0_11 = arith.constant 0 : index
    %27 = vector.load %arg4[%c0_10, %c0_11] : memref<8x32xf32, #tpu.memory_space<vmem>>, vector<8x32xf32>
    tpu.vector_store %arg4[%c0_10, %c0_11], %26 {strides = array<i32>} : memref<8x32xf32, #tpu.memory_space<vmem>>, vector<8x32xf32>,
    return
  }
  func.func @transform_0(%arg0: i32) -> (i32, i32) {
    %c0_i32 = arith.constant 0 : i32
    %c0_i32_0 = arith.constant 0 : i32
    return %arg0, %c0_i32 : i32, i32
  }
  func.func @transform_1(%arg0: i32) -> (i32, i32) {
    %c0_i32 = arith.constant 0 : i32
    %c0_i32_0 = arith.constant 0 : i32
    %c0_i32_1 = arith.constant 0 : i32
    return %c0_i32, %c0_i32_0 : i32, i32
  }
  func.func @transform_2(%arg0: i32) -> (i32, i32) {
    %c0_i32 = arith.constant 0 : i32
    %c0_i32_0 = arith.constant 0 : i32
    %c0_i32_1 = arith.constant 0 : i32
    return %c0_i32, %c0_i32_0 : i32, i32
  }
  func.func @transform_3(%arg0: i32) -> (i32, i32) {
    %c0_i32 = arith.constant 0 : i32
    %c0_i32_0 = arith.constant 0 : i32
    return %arg0, %c0_i32 : i32, i32
  }
}

</mosaic_0001>

<llo_original>
// kernel: tpu_custom_call.1
$region0: #{tpu_custom_call.1}
  #allocation0 [shape = 'u32[]', space=smem, size = 0x4, offset = 0x4, fixed_abs, tag = 'smem constant byte address 0x4 - core index']
  #allocation1 [shape = 'u32[144,128]{1,0:T(1,128)}', space=vmem, size = 0x12000, scoped, tag = 'internal scratch']
  %s0 = inlined_call_operand.hbm [shape: f32[16,32], index: 0, kind: input, shape index: {}]
  %s1 = inlined_call_operand.vmem [shape: f32[1,32], index: 1, kind: input, shape index: {}]
  %s2 = inlined_call_operand.vmem [shape: f32[1,32], index: 2, kind: input, shape index: {}]
  %s3 = inlined_call_operand.hbm [shape: f32[16,32], index: 3, kind: output, shape index: {}]
  %s4 = sld [smem:[#allocation0]]
  $region49: #{tpu_custom_call.1} parent=0
    _
  %s6 = ssub.s32 1, %s4
  %s7 = scalar_select 0, %s6, %s4
  $region1: #{tpu_custom_call.1} parent=0
    #allocation2 [shape = 'u8[8192]{0}', space=vmem, size = 0x2000, scoped, tag = 'input window, operand 0']
    #allocation3 [shape = 's32[2]{0}', space=sflag, size = 0x8, scoped, tag = 'scoped memory for tpu_custom_call.1']
    #allocation4 [shape = 's32[2]{0}', space=sflag, size = 0x8, scoped, tag = 'scoped memory for tpu_custom_call.1']
    #allocation5 [shape = 'u8[8192]{0}', space=vmem, size = 0x2000, scoped, tag = 'output window, operand 0']
    %8 = vsyncpa [#allocation3], 0
    %s9 = scalar_lea.sflag [#allocation3], 1
    %10 = vsyncpa %s9, 0
    %11 = vsyncpa [#allocation4], 0
    %s12 = scalar_lea.sflag [#allocation4], 1
    %13 = vsyncpa %s12, 0
    loop: start=0, step=1, limit=4
    $region2: #{tpu_custom_call.1} parent=1 // loop_pre_header
      _
    $region3: #{tpu_custom_call.1} parent=1 // loop_header
      %s15 = sphi 0, %s19
      %p16 = scmp.ge.s32.totalorder %s15, 4
      %s25 = sphi 0, %s27
      %s28 = sphi 0, %s25
      %s29 = sphi 0, %s28
      %s45 = sphi 0, %s29
      %s49 = sphi 0, %s49
      %s51 = sphi 0, %s49
      %s52 = sphi 0, %s51
      %s66 = sphi 0, %s52
      %s70 = sphi 0, %s70
      %s72 = sphi 0, %s70
      %s73 = sphi 0, %s72
      %s87 = sphi 0, %s73
      %s93 = sphi 0, %s95
      %s96 = sphi 0, %s93
      %s97 = sphi 0, %s96
      %s113 = sphi 0, %s97
    $region4: #{tpu_custom_call.1} parent=1 // loop_header_branch
      %18 = sbr.rel (%p16) target = $region8
    $region5: #{tpu_custom_call.1} parent=1 // loop_body
      %s20 = ssub.s32 %s15, 1
      %s21 = ssub.s32 %s15, 2
      %s22 = sadd.s32 %s15, 1
      %s23 = ssub.s32 %s15, %s22
      %p24 = scmp.eq.s32.totalorder %s23, 0
      %s26 = sadd.s32 %s25, 1
      %s27 = scalar_select %p24, %s25, %s26
      %p30 = pneg %p24
      %p31 = scmp.eq.s32.totalorder %s15, 1
      %p32 = por %p30, %p31
      %p33 = scmp.ne.s32.totalorder %s25, %s28
      %p34 = scmp.eq.s32.totalorder %s15, 0
      %p35 = por %p33, %p34
      %p36 = scmp.ne.s32.totalorder %s25, %s28
      %p37 = scmp.eq.s32.totalorder %s20, 1
      %p38 = por %p36, %p37
      %p39 = scmp.ne.s32.totalorder %s28, %s29
      %p40 = scmp.eq.s32.totalorder %s20, 0
      %p41 = por %p39, %p40
      %p42 = scmp.ne.s32.totalorder %s28, %s29
      %p43 = scmp.eq.s32.totalorder %s21, 1
      %p44 = por %p42, %p43
      %p46 = scmp.ne.s32.totalorder %s29, %s45
      %p47 = scmp.eq.s32.totalorder %s21, 0
      %p48 = por %p46, %p47
      %s50 = sadd.s32 %s49, 1
      %p53 = scmp.eq.s32.totalorder %s15, 1
      %p54 = scmp.ne.s32.totalorder %s49, %s51
      %p55 = scmp.eq.s32.totalorder %s15, 0
      %p56 = por %p54, %p55
      %p57 = scmp.ne.s32.totalorder %s49, %s51
      %p58 = scmp.eq.s32.totalorder %s20, 1
      %p59 = por %p57, %p58
      %p60 = scmp.ne.s32.totalorder %s51, %s52
      %p61 = scmp.eq.s32.totalorder %s20, 0
      %p62 = por %p60, %p61
      %p63 = scmp.ne.s32.totalorder %s51, %s52
      %p64 = scmp.eq.s32.totalorder %s21, 1
      %p65 = por %p63, %p64
      %p67 = scmp.ne.s32.totalorder %s52, %s66
      %p68 = scmp.eq.s32.totalorder %s21, 0
      %p69 = por %p67, %p68
      %s71 = sadd.s32 %s70, 1
      %p74 = scmp.eq.s32.totalorder %s15, 1
      %p75 = scmp.ne.s32.totalorder %s70, %s72
      %p76 = scmp.eq.s32.totalorder %s15, 0
      %p77 = por %p75, %p76
      %p78 = scmp.ne.s32.totalorder %s70, %s72
      %p79 = scmp.eq.s32.totalorder %s20, 1
      %p80 = por %p78, %p79
      %p81 = scmp.ne.s32.totalorder %s72, %s73
      %p82 = scmp.eq.s32.totalorder %s20, 0
      %p83 = por %p81, %p82
      %p84 = scmp.ne.s32.totalorder %s72, %s73
      %p85 = scmp.eq.s32.totalorder %s21, 1
      %p86 = por %p84, %p85
      %p88 = scmp.ne.s32.totalorder %s73, %s87
      %p89 = scmp.eq.s32.totalorder %s21, 0
      %p90 = por %p88, %p89
      %s91 = ssub.s32 %s15, %s22
      %p92 = scmp.eq.s32.totalorder %s91, 0
      %s94 = sadd.s32 %s93, 1
      %s95 = scalar_select %p92, %s93, %s94
      %p98 = pneg %p92
      %p99 = scmp.eq.s32.totalorder %s15, 1
      %p100 = por %p98, %p99
      %p101 = scmp.ne.s32.totalorder %s93, %s96
      %p102 = scmp.eq.s32.totalorder %s15, 0
      %p103 = por %p101, %p102
      %p104 = scmp.ne.s32.totalorder %s93, %s96
      %p105 = scmp.eq.s32.totalorder %s20, 1
      %p106 = por %p104, %p105
      %p107 = scmp.ne.s32.totalorder %s96, %s97
      %p108 = scmp.eq.s32.totalorder %s20, 0
      %p109 = por %p107, %p108
      %p110 = scmp.ne.s32.totalorder %s96, %s97
      %p111 = scmp.eq.s32.totalorder %s21, 1
      %p112 = por %p110, %p111
      %p114 = scmp.ne.s32.totalorder %s97, %s113
      %p115 = scmp.eq.s32.totalorder %s21, 0
      %p116 = por %p114, %p115
      %p117 = scmp.le.s32.totalorder 1, %s15
      %p118 = scmp.lt.s32.totalorder %s15, 3
      %p119 = pnand %p117, %p118
      %p120 = pneg %p119
      // Predicated region
      $region9: #{tpu_custom_call.1} parent=5 // pred_check
        _
      $region10: #{tpu_custom_call.1} parent=5 // pred_check_branch
        %122 = sbr.rel (%p119) target = $region12
      $region11: #{tpu_custom_call.1} parent=5 // pred_region
        %s123 = ssub.s32 %s15, 1
        // Predicated region
        $region13: #{tpu_custom_call.1} parent=11 // pred_check
          %p124 = pneg %p62
        $region14: #{tpu_custom_call.1} parent=11 // pred_check_branch
          %126 = sbr.rel (%p124) target = $region16
        $region15: #{tpu_custom_call.1} parent=11 // pred_region
          _
        $region16: #{tpu_custom_call.1} parent=11 // pred_fallthru
          _
        // Predicated region
        $region17: #{tpu_custom_call.1} parent=11 // pred_check
          %p127 = pneg %p83
        $region18: #{tpu_custom_call.1} parent=11 // pred_check_branch
          %129 = sbr.rel (%p127) target = $region20
        $region19: #{tpu_custom_call.1} parent=11 // pred_region
          _
        $region20: #{tpu_custom_call.1} parent=11 // pred_fallthru
          _
      $region12: #{tpu_custom_call.1} parent=5 // pred_fallthru
        _
      %p130 = scmp.lt.s32.totalorder %s15, 2
      // Predicated region
      $region21: #{tpu_custom_call.1} parent=5 // pred_check
        %p131 = pneg %p130
      $region22: #{tpu_custom_call.1} parent=5 // pred_check_branch
        %133 = sbr.rel (%p131) target = $region24
      $region23: #{tpu_custom_call.1} parent=5 // pred_region
        // Predicated region
        $region25: #{tpu_custom_call.1} parent=23 // pred_check
          %p134 = pneg %p35
        $region26: #{tpu_custom_call.1} parent=23 // pred_check_branch
          %136 = sbr.rel (%p134) target = $region28
        $region27: #{tpu_custom_call.1} parent=23 // pred_region
          %s137 = sand.u32 %s25, 1
          %s138 = scalar_lea.sflag [#allocation3], %s137
          %s139 = sand.u32 %s25, 1
          %s140 = smul.addr %s139, 8
          %s141 = scalar_lea.vmem [#allocation2], %s140
          %s143 = ssub.s32 128, 128
          %144 = vsyncadd %s138, %s143
          %s145 = smul.addr %s15, 128
          %s146 = scalar_lea.hbm %s0, %s145
          %s148 = sshll.u32 %s141, 4
          %s149 = int_to_ptr.vmem [resolvable:$true] %s148
          %151 = dma.hbm_to_vmem [thread:$0]  %s146, 128, %s149, %s138
        $region28: #{tpu_custom_call.1} parent=23 // pred_fallthru
          _
      $region24: #{tpu_custom_call.1} parent=5 // pred_fallthru
        _
      %p152 = scmp.le.s32.totalorder 1, %s15
      %p153 = scmp.lt.s32.totalorder %s15, 3
      %p154 = pnand %p152, %p153
      %p155 = pneg %p154
      // Predicated region
      $region29: #{tpu_custom_call.1} parent=5 // pred_check
        _
      $region30: #{tpu_custom_call.1} parent=5 // pred_check_branch
        %157 = sbr.rel (%p154) target = $region32
      $region31: #{tpu_custom_call.1} parent=5 // pred_region
        %s158 = ssub.s32 %s15, 1
        %s159 = sand.u32 %s28, 1
        %s160 = scalar_lea.sflag [#allocation3], %s159
        %s161 = sand.u32 %s28, 1
        %s162 = smul.addr %s161, 8
        %s163 = scalar_lea.vmem [#allocation2], %s162
        // Predicated region
        $region33: #{tpu_custom_call.1} parent=31 // pred_check
          %p164 = pneg %p41
        $region34: #{tpu_custom_call.1} parent=31 // pred_check_branch
          %166 = sbr.rel (%p164) target = $region36
        $region35: #{tpu_custom_call.1} parent=31 // pred_region
          %167 = dma.done %s160, 128
        $region36: #{tpu_custom_call.1} parent=31 // pred_fallthru
          _
        %s168 = sand.u32 %s28, 1
        %s169 = scalar_lea.sflag [#allocation3], %s168
        %s170 = sand.u32 %s28, 1
        %s171 = smul.addr %s170, 8
        %s172 = scalar_lea.vmem [#allocation2], %s171
        %p173 = pneg %p41
        %p174 = pneg %p38
        %p175 = pneg %p62
        %p176 = pneg %p59
        %p177 = pneg %p83
        %p178 = pneg %p80
        %p179 = pneg %p109
        %p180 = pneg %p106
        %s181 = sand.u32 %s96, 1
        %s182 = scalar_lea.sflag [#allocation4], %s181
        %s183 = sand.u32 %s96, 1
        %s184 = smul.addr %s183, 8
        %s185 = scalar_lea.vmem [#allocation5], %s184
        %v186 = vld [vmem:[%s163] sm:$0xff]
        %vm187 = vcmask 261120
        %v188 = vsel %vm187, %v186, 0.0
        %189 = vadd.xlane.f32.xlu0 %v188
        %v190 = vpop.xlane.xlu0 %189
        %v191 = vmul.f32 %v186, %v186
        %v192 = vsel %vm187, %v191, 0.0
        %193 = vadd.xlane.f32.xlu0 %v192
        %v194 = vpop.xlane.xlu0 %193
        %v195 = vmul.f32 %v190, 0.03125
        %v196 = vmul.f32 %v194, 0.03125
        %v197 = vmul.f32 %v195, %v195
        %v198 = vsub.f32 %v196, %v197
        %v199 = vmax.f32 %v198, 0.0
        %v200 = vadd.f32 %v199, 1e-05
        %v201 = vrsqrt.pop %v200
        %v202 = vsub.f32 %v186, %v195
        %v203 = vmul.f32 %v202, %v201
        %v204 = vld [vmem:[%s1] sm:$0x1]
        %v206 = vlaneseq
        %v207 = vshrl.u32 %v206, 7
        %v208 = vsub.s32 0, %v207
        %v209 = vrot.slane %v204, %v208
        %v211 = vmul.f32 %v203, %v209
        %v212 = vld [vmem:[%s2] sm:$0x1]
        %v214 = vlaneseq
        %v215 = vshrl.u32 %v214, 7
        %v216 = vsub.s32 0, %v215
        %v217 = vrot.slane %v212, %v216
        %v219 = vadd.f32 %v211, %v217
        %220 = vst.msk [vmem:[%s185] sm:$0xff] %vm187, %v219
        %s221 = sand.u32 %s96, 1
        %s222 = scalar_lea.sflag [#allocation4], %s221
        %s223 = sand.u32 %s96, 1
        %s224 = smul.addr %s223, 8
        %s225 = scalar_lea.vmem [#allocation5], %s224
        // Predicated region
        $region37: #{tpu_custom_call.1} parent=31 // pred_check
          %p226 = pneg %p106
        $region38: #{tpu_custom_call.1} parent=31 // pred_check_branch
          %228 = sbr.rel (%p226) target = $region40
        $region39: #{tpu_custom_call.1} parent=31 // pred_region
          %s230 = ssub.s32 128, 128
          %231 = vsyncadd %s222, %s230
          %s232 = smul.addr %s20, 128
          %s233 = scalar_lea.hbm %s3, %s232
          %s235 = sshll.u32 %s225, 4
          %s236 = int_to_ptr.vmem [resolvable:$true] %s235
          %238 = dma.vmem_to_hbm [thread:$0]  %s236, 128, %s233, %s222
        $region40: #{tpu_custom_call.1} parent=31 // pred_fallthru
          _
      $region32: #{tpu_custom_call.1} parent=5 // pred_fallthru
        _
      %p239 = scmp.le.s32.totalorder 2, %s15
      // Predicated region
      $region41: #{tpu_custom_call.1} parent=5 // pred_check
        %p240 = pneg %p239
      $region42: #{tpu_custom_call.1} parent=5 // pred_check_branch
        %242 = sbr.rel (%p240) target = $region44
      $region43: #{tpu_custom_call.1} parent=5 // pred_region
        %s243 = ssub.s32 %s15, 2
        // Predicated region
        $region45: #{tpu_custom_call.1} parent=43 // pred_check
          %p244 = pneg %p112
        $region46: #{tpu_custom_call.1} parent=43 // pred_check_branch
          %246 = sbr.rel (%p244) target = $region48
        $region47: #{tpu_custom_call.1} parent=43 // pred_region
          %s247 = sand.u32 %s97, 1
          %s248 = scalar_lea.sflag [#allocation4], %s247
          %s249 = sand.u32 %s97, 1
          %s250 = smul.addr %s249, 8
          %s251 = scalar_lea.vmem [#allocation5], %s250
          %252 = dma.done %s248, 128
        $region48: #{tpu_custom_call.1} parent=43 // pred_fallthru
          _
      $region44: #{tpu_custom_call.1} parent=5 // pred_fallthru
        _
    $region6: #{tpu_custom_call.1} parent=1 // loop_footer
      %s19 = sadd.s32 1, %s15
    $region7: #{tpu_custom_call.1} parent=1 // loop_footer_branch
      %14 = sbr.rel target = $region3
    $region8: #{tpu_custom_call.1} parent=1 // loop_exit
      _
    %253 = vsyncpa [#allocation3], 1
    %s254 = scalar_lea.sflag [#allocation3], 1
    %255 = vsyncpa %s254, 1
    %256 = vsyncpa [#allocation4], 1
    %s257 = scalar_lea.sflag [#allocation4], 1
    %258 = vsyncpa %s257, 1

</llo_original>
